<compile_context>
chip_gen: v7x
topology: tpu7x:2x2x1
jax: 0.10.0
libtpu: 0.0.40
codegen_flags: <defaults>
</compile_context>

<pallas_src>
import math

import jax
import jax.numpy as jnp
from jax.experimental import pallas as pl
from jax.experimental.pallas import tpu as pltpu


# ------------------------------------------------------------------ pe buffer
def _build_pe(d_model: int, max_len: int = 5000, dtype=jnp.float32) -> jnp.ndarray:
    """Replicates the PyTorch __init__ buffer exactly: shape (max_len, 1, d_model)."""
    assert d_model % 2 == 0, "d_model must be even (same constraint as the PyTorch module)"
    position = jnp.arange(0, max_len, dtype=jnp.float32)[:, None]            # (max_len, 1)
    div_term = jnp.exp(
        jnp.arange(0, d_model, 2, dtype=jnp.float32) * (-math.log(10000.0) / d_model)
    )                                                                         # (d_model//2,)
    angles = position * div_term                                              # (max_len, d_model//2)
    pe = jnp.zeros((max_len, d_model), dtype=jnp.float32)
    pe = pe.at[:, 0::2].set(jnp.sin(angles))
    pe = pe.at[:, 1::2].set(jnp.cos(angles))
    return pe[:, None, :].astype(dtype)                                       # (max_len, 1, d_model)


# ------------------------------------------------------------------ kernels
def _pe_add_bcast_kernel(x_ref, pe_ref, o_ref):
    # x_ref : (tS, B, D) block in VMEM
    # pe_ref: (tS, D)    block in VMEM (lane-dense, no padded sublane dim)
    pe = pe_ref[...]
    o_ref[...] = (x_ref[...] + pe[:, None, :]).astype(o_ref.dtype)


def _pe_add_2d_kernel(x_ref, pe_ref, o_ref):
    # batch == 1 fast path: both blocks are dense (tS, D), plain elementwise add.
    o_ref[...] = (x_ref[...] + pe_ref[...]).astype(o_ref.dtype)


# ------------------------------------------------------------------ tiling helpers
def _round_up(n: int, m: int) -> int:
    return ((n + m - 1) // m) * m


def _vmem_budget_and_limit() -> tuple[int, int]:
    """Generation-aware (budget for double-buffered blocks, scoped vmem_limit_bytes)."""
    cap = 64 * 1024 * 1024                      # conservative default = v7x per-TC VMEM
    try:
        info = pltpu.get_tpu_info()
        cap = int(getattr(info, "vmem_capacity_bytes", cap) or cap)
    except Exception:
        pass
    budget = cap // 2                           # target working set (x2 double-buffered below)
    limit = min((cap * 3) // 4, cap - (8 << 20))
    limit = max(limit, budget + (4 << 20))
    return budget, limit


def _choose_tile_rows(S: int, B: int, D: int, itemsize: int,
                      vmem_budget_bytes: int, flat: bool) -> int:
    """Largest seq-tile whose double-buffered, *padding-aware* blocks fit the budget."""
    sub = max(8, 32 // itemsize)                # sublane multiple: 8 (f32), 16 (bf16), 32 (int8)
    d_pad = _round_up(D, 128)                   # lane padding of the last dim
    if flat:
        bytes_per_row = 3 * d_pad * itemsize                     # x + out + pe, all dense
    else:
        b_pad = _round_up(B, sub)                                # batch sits on the sublane axis
        bytes_per_row = (2 * b_pad * d_pad + d_pad) * itemsize   # x block + out block + pe row
    tile = vmem_budget_bytes // (2 * bytes_per_row)              # x2: double buffering
    tile = max(1, min(int(tile), S))
    if S >= 8:
        tile = max(8, (tile // 8) * 8)          # keep the pe block sublane-aligned
    return tile


def _sanitize_tile(S: int, tS: int) -> int:
    """Keep tS legal for the 2-D pe BlockSpec: multiple of 8, or equal to (small) S."""
    tS = max(1, min(int(tS), S))
    if S < 8:
        return S
    if tS % 8 != 0 and tS != S:
        tS = max(8, (tS // 8) * 8)
    return tS


def _prefer_even_grid(S: int, tS: int) -> int:
    """Nudge the grid to an even length (>=2) so v7x's two TensorCores split it evenly."""
    if S < 16 or tS % 8 != 0:
        return tS
    g = pl.cdiv(S, tS)
    if g == 1:
        cand = _round_up(pl.cdiv(S, 2), 8)
        return cand if 0 < cand < S else tS
    if g % 2 == 1:
        cand = max(8, (pl.cdiv(S, g + 1) // 8) * 8)
        if 0 < cand <= tS and pl.cdiv(S, cand) % 2 == 0:
            return cand
    return tS


# ------------------------------------------------------------------ forward
def positional_encoding_forward(x: jnp.ndarray, pe: jnp.ndarray, *,
                                tile_seq: int | None = None,
                                vmem_budget_bytes: int | None = None,
                                donate_x: bool = False) -> jnp.ndarray:
    """x: (seq_len, batch, d_model); pe: (max_len, 1, d_model) or (max_len, d_model)."""
    S, B, D = x.shape
    max_len = pe.shape[0]
    if pe.ndim == 3:
        assert pe.shape == (max_len, 1, D), f"pe shape {pe.shape} incompatible with x {x.shape}"
        pe2 = pe.reshape(max_len, D)
    else:
        assert pe.shape == (max_len, D), f"pe shape {pe.shape} incompatible with x {x.shape}"
        pe2 = pe
    assert S <= max_len, f"seq_len {S} exceeds max_len {max_len}"

    if pe2.dtype != x.dtype:
        # Fallback only: prefer building pe in the compute dtype once at init (_build_pe(dtype=...)).
        # Under jit this per-call convert costs a full (max_len, D) HBM pass.
        pe2 = pe2.astype(x.dtype)

    itemsize = x.dtype.itemsize
    budget, vmem_limit = _vmem_budget_and_limit()
    if vmem_budget_bytes is not None:
        budget = int(vmem_budget_bytes)
        vmem_limit = max(vmem_limit, budget + (4 << 20))

    flat = (B == 1)  # decode-style fast path: no batch sublane waste, no in-kernel broadcast

    if tile_seq is None:
        tS = _choose_tile_rows(S, B, D, itemsize, budget, flat)
        tS = _sanitize_tile(S, tS)
        tS = _prefer_even_grid(S, tS)
    else:
        tS = _sanitize_tile(S, tile_seq)

    # When tS is sublane-aligned the pe BlockSpec windows into the full (max_len, D) buffer
    # (only ceil(S/tS) blocks are ever DMA'd). Otherwise (tiny S) slice so block == array.
    pe_in = pe2 if (tS % 8 == 0) else pe2[:S]

    grid = (pl.cdiv(S, tS),)
    cost = pl.CostEstimate(flops=S * B * D, transcendentals=0,
                           bytes_accessed=(2 * S * B * D + S * D) * itemsize)
    cparams = pltpu.CompilerParams(dimension_semantics=("parallel",),
                                   vmem_limit_bytes=int(vmem_limit))
    io_alias = {0: 0} if donate_x else {}

    if flat:
        x2 = x.reshape(S, D)
        out2 = pl.pallas_call(
            _pe_add_2d_kernel,
            out_shape=jax.ShapeDtypeStruct((S, D), x.dtype),
            grid_spec=pltpu.PrefetchScalarGridSpec(
                num_scalar_prefetch=0,
                grid=grid,
                in_specs=[
                    pl.BlockSpec((tS, D), lambda i: (i, 0)),   # x rows
                    pl.BlockSpec((tS, D), lambda i: (i, 0)),   # pe rows
                ],
                out_specs=pl.BlockSpec((tS, D), lambda i: (i, 0)),
            ),
            compiler_params=cparams,
            cost_estimate=cost,
            input_output_aliases=io_alias,
        )(x2, pe_in)
        return out2.reshape(S, 1, D)

    return pl.pallas_call(
        _pe_add_bcast_kernel,
        out_shape=jax.ShapeDtypeStruct((S, B, D), x.dtype),
        grid_spec=pltpu.PrefetchScalarGridSpec(
            num_scalar_prefetch=0,
            grid=grid,
            in_specs=[
                pl.BlockSpec((tS, B, D), lambda i: (i, 0, 0)),  # x seq-tile
                pl.BlockSpec((tS, D), lambda i: (i, 0)),        # dense 2-D pe rows
            ],
            out_specs=pl.BlockSpec((tS, B, D), lambda i: (i, 0, 0)),
        ),
        compiler_params=cparams,
        cost_estimate=cost,
        input_output_aliases=io_alias,
    )(x, pe_in)


# ------------------------------------------------------------------ demo / self-test
if __name__ == "__main__":
    seq_len, batch, d_model, max_len = 16, 2, 32, 64

    k0, k1 = jax.random.split(jax.random.PRNGKey(0))
    x = jax.random.normal(k0, (seq_len, batch, d_model), dtype=jnp.float32)

    # pe built once, already in the compute dtype (no per-call cast).
    pe = _build_pe(d_model, max_len, dtype=x.dtype)
    ref = x + pe[:seq_len]

    # 1) Explicit tile -> 2-step grid (even), exercises the pipelined broadcast path.
    out_tiled = jax.block_until_ready(positional_encoding_forward(x, pe, tile_seq=8))
    assert out_tiled.shape == (seq_len, batch, d_model)
    assert jnp.allclose(out_tiled, ref, atol=1e-6), "tiled kernel mismatch vs reference"

    # 2) Auto-chosen tile (padding-aware budget + even-grid nudge).
    out_auto = jax.block_until_ready(positional_encoding_forward(x, pe))
    assert jnp.allclose(out_auto, ref, atol=1e-6), "auto-tile kernel mismatch vs reference"

    # 3) batch == 1 flat fast path (decode-style shapes).
    x1 = jax.random.normal(k1, (seq_len, 1, d_model), dtype=jnp.float32)
    ref1 = x1 + pe[:seq_len]
    out_flat = jax.block_until_ready(positional_encoding_forward(x1, pe, tile_seq=8))
    assert out_flat.shape == (seq_len, 1, d_model)
    assert jnp.allclose(out_flat, ref1, atol=1e-6), "flat (batch=1) kernel mismatch vs reference"

    print("KERNEL_OK")
</pallas_src>

<mosaic_0001>
module attributes {stable_mosaic.version = 11 : i64} {
  func.func @_pe_add_bcast_kernel(%arg0: i32, %arg1: memref<8x2x32xf32, #tpu.memory_space<vmem>>, %arg2: memref<8x32xf32, #tpu.memory_space<vmem>>, %arg3: memref<8x2x32xf32, #tpu.memory_space<vmem>>) attributes {dimension_semantics = [#tpu.dimension_semantics<parallel>], iteration_bounds = array<i64: 2>, scalar_prefetch = 0 : i64, scratch_operands = 0 : i64, tpu.core_type = #tpu.core_type<tc>, window_params = [{transform_indices = @transform_0, window_bounds = array<i64: 8, 2, 32>}, {transform_indices = @transform_1, window_bounds = array<i64: 8, 32>}, {transform_indices = @transform_2, window_bounds = array<i64: 8, 2, 32>}]} {
    %c0 = arith.constant 0 : index
    %c0_0 = arith.constant 0 : index
    %0 = vector.load %arg2[%c0, %c0_0] : memref<8x32xf32, #tpu.memory_space<vmem>>, vector<8x32xf32>
    %c0_1 = arith.constant 0 : index
    %c0_2 = arith.constant 0 : index
    %c0_3 = arith.constant 0 : index
    %1 = vector.load %arg1[%c0_1, %c0_2, %c0_3] : memref<8x2x32xf32, #tpu.memory_space<vmem>>, vector<8x2x32xf32>
    %2 = vector.shape_cast %0 : vector<8x32xf32> to vector<8x1x32xf32>
    %3 = vector.broadcast %2 : vector<8x1x32xf32> to vector<8x2x32xf32>
    %4 = arith.addf %1, %3 : vector<8x2x32xf32>
    %c0_4 = arith.constant 0 : index
    %c0_5 = arith.constant 0 : index
    %c0_6 = arith.constant 0 : index
    %5 = vector.load %arg3[%c0_4, %c0_5, %c0_6] : memref<8x2x32xf32, #tpu.memory_space<vmem>>, vector<8x2x32xf32>
    tpu.vector_store %arg3[%c0_4, %c0_5, %c0_6], %4 {strides = array<i32>} : memref<8x2x32xf32, #tpu.memory_space<vmem>>, vector<8x2x32xf32>,
    return
  }
  func.func @transform_0(%arg0: i32) -> (i32, i32, i32) {
    %c0_i32 = arith.constant 0 : i32
    %c0_i32_0 = arith.constant 0 : i32
    %c0_i32_1 = arith.constant 0 : i32
    return %arg0, %c0_i32, %c0_i32_0 : i32, i32, i32
  }
  func.func @transform_1(%arg0: i32) -> (i32, i32) {
    %c0_i32 = arith.constant 0 : i32
    %c0_i32_0 = arith.constant 0 : i32
    return %arg0, %c0_i32 : i32, i32
  }
  func.func @transform_2(%arg0: i32) -> (i32, i32, i32) {
    %c0_i32 = arith.constant 0 : i32
    %c0_i32_0 = arith.constant 0 : i32
    %c0_i32_1 = arith.constant 0 : i32
    return %arg0, %c0_i32, %c0_i32_0 : i32, i32, i32
  }
}

</mosaic_0001>

<llo_original>
// kernel: tpu_custom_call.1
$region0: #{tpu_custom_call.1}
  #allocation0 [shape = 'u32[]', space=smem, size = 0x4, offset = 0x4, fixed_abs, tag = 'smem constant byte address 0x4 - core index']
  #allocation1 [shape = 'u32[144,128]{1,0:T(1,128)}', space=vmem, size = 0x12000, scoped, tag = 'internal scratch']
  %s0 = inlined_call_operand.vmem [shape: f32[16,2,32], index: 0, kind: input, shape index: {}]
  %s1 = inlined_call_operand.vmem [shape: f32[64,32], index: 1, kind: input, shape index: {}]
  %s2 = inlined_call_operand.hbm [shape: f32[16,2,32], index: 2, kind: output, shape index: {}]
  %s3 = sld [smem:[#allocation0]]
  $region41: #{tpu_custom_call.1} parent=0
    _
  %s5 = ssub.s32 1, %s3
  %s6 = scalar_select 0, %s5, %s3
  $region1: #{tpu_custom_call.1} parent=0
    #allocation2 [shape = 'u8[16384]{0}', space=vmem, size = 0x4000, scoped, tag = 'output window, operand 0']
    #allocation3 [shape = 's32[2]{0}', space=sflag, size = 0x8, scoped, tag = 'scoped memory for tpu_custom_call.1']
    %7 = vsyncpa [#allocation3], 0
    %s8 = scalar_lea.sflag [#allocation3], 1
    %9 = vsyncpa %s8, 0
    loop: start=0, step=1, limit=4
    $region2: #{tpu_custom_call.1} parent=1 // loop_pre_header
      _
    $region3: #{tpu_custom_call.1} parent=1 // loop_header
      %s11 = sphi 0, %s15
      %p12 = scmp.ge.s32.totalorder %s11, 4
      %s21 = sphi 0, %s23
      %s24 = sphi 0, %s21
      %s25 = sphi 0, %s24
      %s41 = sphi 0, %s25
      %s47 = sphi 0, %s49
      %s50 = sphi 0, %s47
      %s51 = sphi 0, %s50
      %s67 = sphi 0, %s51
      %s73 = sphi 0, %s75
      %s76 = sphi 0, %s73
      %s77 = sphi 0, %s76
      %s93 = sphi 0, %s77
    $region4: #{tpu_custom_call.1} parent=1 // loop_header_branch
      %14 = sbr.rel (%p12) target = $region8
    $region5: #{tpu_custom_call.1} parent=1 // loop_body
      %s16 = ssub.s32 %s11, 1
      %s17 = ssub.s32 %s11, 2
      %s18 = sadd.s32 %s11, 1
      %s19 = ssub.s32 %s11, %s18
      %p20 = scmp.eq.s32.totalorder %s19, 0
      %s22 = sadd.s32 %s21, 1
      %s23 = scalar_select %p20, %s21, %s22
      %p26 = pneg %p20
      %p27 = scmp.eq.s32.totalorder %s11, 1
      %p28 = por %p26, %p27
      %p29 = scmp.ne.s32.totalorder %s21, %s24
      %p30 = scmp.eq.s32.totalorder %s11, 0
      %p31 = por %p29, %p30
      %p32 = scmp.ne.s32.totalorder %s21, %s24
      %p33 = scmp.eq.s32.totalorder %s16, 1
      %p34 = por %p32, %p33
      %p35 = scmp.ne.s32.totalorder %s24, %s25
      %p36 = scmp.eq.s32.totalorder %s16, 0
      %p37 = por %p35, %p36
      %p38 = scmp.ne.s32.totalorder %s24, %s25
      %p39 = scmp.eq.s32.totalorder %s17, 1
      %p40 = por %p38, %p39
      %p42 = scmp.ne.s32.totalorder %s25, %s41
      %p43 = scmp.eq.s32.totalorder %s17, 0
      %p44 = por %p42, %p43
      %s45 = ssub.s32 %s11, %s18
      %p46 = scmp.eq.s32.totalorder %s45, 0
      %s48 = sadd.s32 %s47, 1
      %s49 = scalar_select %p46, %s47, %s48
      %p52 = pneg %p46
      %p53 = scmp.eq.s32.totalorder %s11, 1
      %p54 = por %p52, %p53
      %p55 = scmp.ne.s32.totalorder %s47, %s50
      %p56 = scmp.eq.s32.totalorder %s11, 0
      %p57 = por %p55, %p56
      %p58 = scmp.ne.s32.totalorder %s47, %s50
      %p59 = scmp.eq.s32.totalorder %s16, 1
      %p60 = por %p58, %p59
      %p61 = scmp.ne.s32.totalorder %s50, %s51
      %p62 = scmp.eq.s32.totalorder %s16, 0
      %p63 = por %p61, %p62
      %p64 = scmp.ne.s32.totalorder %s50, %s51
      %p65 = scmp.eq.s32.totalorder %s17, 1
      %p66 = por %p64, %p65
      %p68 = scmp.ne.s32.totalorder %s51, %s67
      %p69 = scmp.eq.s32.totalorder %s17, 0
      %p70 = por %p68, %p69
      %s71 = ssub.s32 %s11, %s18
      %p72 = scmp.eq.s32.totalorder %s71, 0
      %s74 = sadd.s32 %s73, 1
      %s75 = scalar_select %p72, %s73, %s74
      %p78 = pneg %p72
      %p79 = scmp.eq.s32.totalorder %s11, 1
      %p80 = por %p78, %p79
      %p81 = scmp.ne.s32.totalorder %s73, %s76
      %p82 = scmp.eq.s32.totalorder %s11, 0
      %p83 = por %p81, %p82
      %p84 = scmp.ne.s32.totalorder %s73, %s76
      %p85 = scmp.eq.s32.totalorder %s16, 1
      %p86 = por %p84, %p85
      %p87 = scmp.ne.s32.totalorder %s76, %s77
      %p88 = scmp.eq.s32.totalorder %s16, 0
      %p89 = por %p87, %p88
      %p90 = scmp.ne.s32.totalorder %s76, %s77
      %p91 = scmp.eq.s32.totalorder %s17, 1
      %p92 = por %p90, %p91
      %p94 = scmp.ne.s32.totalorder %s77, %s93
      %p95 = scmp.eq.s32.totalorder %s17, 0
      %p96 = por %p94, %p95
      %p97 = scmp.le.s32.totalorder 1, %s11
      %p98 = scmp.lt.s32.totalorder %s11, 3
      %p99 = pnand %p97, %p98
      %p100 = pneg %p99
      // Predicated region
      $region9: #{tpu_custom_call.1} parent=5 // pred_check
        _
      $region10: #{tpu_custom_call.1} parent=5 // pred_check_branch
        %102 = sbr.rel (%p99) target = $region12
      $region11: #{tpu_custom_call.1} parent=5 // pred_region
        %s103 = ssub.s32 %s11, 1
      $region12: #{tpu_custom_call.1} parent=5 // pred_fallthru
        _
      %p104 = scmp.lt.s32.totalorder %s11, 2
      // Predicated region
      $region13: #{tpu_custom_call.1} parent=5 // pred_check
        %p105 = pneg %p104
      $region14: #{tpu_custom_call.1} parent=5 // pred_check_branch
        %107 = sbr.rel (%p105) target = $region16
      $region15: #{tpu_custom_call.1} parent=5 // pred_region
        // Predicated region
        $region17: #{tpu_custom_call.1} parent=15 // pred_check
          %p108 = pneg %p31
        $region18: #{tpu_custom_call.1} parent=15 // pred_check_branch
          %110 = sbr.rel (%p108) target = $region20
        $region19: #{tpu_custom_call.1} parent=15 // pred_region
          %s111 = smul.u32 8, %s11
          %p112 = scmp.lt.s32.totalorder %s111, 15
          %s113 = scalar_select %p112, %s111, 15
          %s114 = smul.addr %s113, 2
          %s115 = scalar_lea.vmem %s0, %s114
          %s116 = smul.u32 8, %s11
        $region20: #{tpu_custom_call.1} parent=15 // pred_fallthru
          _
        // Predicated region
        $region21: #{tpu_custom_call.1} parent=15 // pred_check
          %p117 = pneg %p57
        $region22: #{tpu_custom_call.1} parent=15 // pred_check_branch
          %119 = sbr.rel (%p117) target = $region24
        $region23: #{tpu_custom_call.1} parent=15 // pred_region
          %p120 = scmp.lt.s32.totalorder %s11, 7
          %s121 = scalar_select %p120, %s11, 7
          %s122 = smul.addr %s121, 8
          %s123 = scalar_lea.vmem %s1, %s122
        $region24: #{tpu_custom_call.1} parent=15 // pred_fallthru
          _
      $region16: #{tpu_custom_call.1} parent=5 // pred_fallthru
        _
      %p124 = scmp.le.s32.totalorder 1, %s11
      %p125 = scmp.lt.s32.totalorder %s11, 3
      %p126 = pnand %p124, %p125
      %p127 = pneg %p126
      // Predicated region
      $region25: #{tpu_custom_call.1} parent=5 // pred_check
        _
      $region26: #{tpu_custom_call.1} parent=5 // pred_check_branch
        %129 = sbr.rel (%p126) target = $region28
      $region27: #{tpu_custom_call.1} parent=5 // pred_region
        %s130 = ssub.s32 %s11, 1
        %s131 = smul.u32 8, %s16
        %p132 = scmp.lt.s32.totalorder %s131, 15
        %s133 = scalar_select %p132, %s131, 15
        %s134 = smul.addr %s133, 2
        %s135 = scalar_lea.vmem %s0, %s134
        %p136 = pneg %p37
        %p137 = pneg %p34
        %p138 = scmp.lt.s32.totalorder %s16, 7
        %s139 = scalar_select %p138, %s16, 7
        %s140 = smul.addr %s139, 8
        %s141 = scalar_lea.vmem %s1, %s140
        %p142 = pneg %p63
        %p143 = pneg %p60
        %p144 = pneg %p89
        %p145 = pneg %p86
        %s146 = sand.u32 %s76, 1
        %s147 = scalar_lea.sflag [#allocation3], %s146
        %s148 = sand.u32 %s76, 1
        %s149 = smul.addr %s148, 16
        %s150 = scalar_lea.vmem [#allocation2], %s149
        %s151 = smul.u32 8, %s16
        %p152 = scmp.lt.s32.totalorder %s151, 15
        %s153 = scalar_select %p152, %s151, 15
        %s154 = smul.addr %s153, 2
        %s155 = scalar_lea.vmem %s0, %s154
        %s156 = smul.u32 8, %s16
        %p157 = scmp.lt.s32.totalorder %s16, 7
        %s158 = scalar_select %p157, %s16, 7
        %s159 = smul.addr %s158, 8
        %s160 = scalar_lea.vmem %s1, %s159
        %s161 = smul.u32 8, %s16
        %v162 = vld [vmem:[%s160] sm:$0xff]
        %v163 = vld [vmem:[%s155] sm:$0x3]
        %v164 = vld [vmem:[%s155 + $0x2] sm:$0x3]
        %v165 = vld [vmem:[%s155 + $0x4] sm:$0x3]
        %v166 = vld [vmem:[%s155 + $0x6] sm:$0x3]
        %v167 = vld [vmem:[%s155 + $0x8] sm:$0x3]
        %v168 = vld [vmem:[%s155 + $0xa] sm:$0x3]
        %v169 = vld [vmem:[%s155 + $0xc] sm:$0x3]
        %v170 = vld [vmem:[%s155 + $0xe] sm:$0x3]
        %v172 = vcombine.high %v162, %v162
        %v174 = vunpack.c.l.s4 1966171168
        %v175 = vunpack.c.0.s8 %v174
        %v176 = vlaneseq
        %v177 = vshrl.u32 %v176, 7
        %v178 = vsub.s32 %v175, %v177
        %v179 = vrot.slane %v162, %v178
        %v181 = vunpack.c.l.s4 1966171168
        %v182 = vunpack.c.0.s8 %v181
        %v183 = vlaneseq
        %v184 = vshrl.u32 %v183, 7
        %v185 = vsub.s32 %v182, %v184
        %v186 = vrot.slane %v172, %v185
        %v187 = vcombine.high %v179, %v179
        %v188 = vcombine.high %v186, %v186
        %v190 = vunpack.c.l.s4 1966171168
        %v191 = vunpack.c.0.s8 %v190
        %v192 = vlaneseq
        %v193 = vshrl.u32 %v192, 7
        %v194 = vsub.s32 %v191, %v193
        %v195 = vrot.slane %v179, %v194
        %v197 = vunpack.c.l.s4 1966171168
        %v198 = vunpack.c.0.s8 %v197
        %v199 = vlaneseq
        %v200 = vshrl.u32 %v199, 7
        %v201 = vsub.s32 %v198, %v200
        %v202 = vrot.slane %v186, %v201
        %v204 = vunpack.c.l.s4 1966171168
        %v205 = vunpack.c.0.s8 %v204
        %v206 = vlaneseq
        %v207 = vshrl.u32 %v206, 7
        %v208 = vsub.s32 %v205, %v207
        %v209 = vrot.slane %v187, %v208
        %v211 = vunpack.c.l.s4 1966171168
        %v212 = vunpack.c.0.s8 %v211
        %v213 = vlaneseq
        %v214 = vshrl.u32 %v213, 7
        %v215 = vsub.s32 %v212, %v214
        %v216 = vrot.slane %v188, %v215
        %v217 = vcombine.high %v195, %v195
        %v218 = vcombine.high %v202, %v202
        %v219 = vcombine.high %v209, %v209
        %v220 = vcombine.high %v216, %v216
        %v221 = vlaneseq
        %v222 = vshrl.u32 %v221, 7
        %v223 = vsub.s32 0, %v222
        %v224 = vrot.slane %v195, %v223
        %v225 = vlaneseq
        %v226 = vshrl.u32 %v225, 7
        %v227 = vsub.s32 0, %v226
        %v228 = vrot.slane %v209, %v227
        %v229 = vlaneseq
        %v230 = vshrl.u32 %v229, 7
        %v231 = vsub.s32 0, %v230
        %v232 = vrot.slane %v217, %v231
        %v233 = vlaneseq
        %v234 = vshrl.u32 %v233, 7
        %v235 = vsub.s32 0, %v234
        %v236 = vrot.slane %v219, %v235
        %v237 = vlaneseq
        %v238 = vshrl.u32 %v237, 7
        %v239 = vsub.s32 0, %v238
        %v240 = vrot.slane %v202, %v239
        %v241 = vlaneseq
        %v242 = vshrl.u32 %v241, 7
        %v243 = vsub.s32 0, %v242
        %v244 = vrot.slane %v216, %v243
        %v245 = vlaneseq
        %v246 = vshrl.u32 %v245, 7
        %v247 = vsub.s32 0, %v246
        %v248 = vrot.slane %v218, %v247
        %v249 = vlaneseq
        %v250 = vshrl.u32 %v249, 7
        %v251 = vsub.s32 0, %v250
        %v252 = vrot.slane %v220, %v251
        %v261 = vadd.f32 %v163, %v224
        %v262 = vadd.f32 %v164, %v228
        %v263 = vadd.f32 %v165, %v232
        %v264 = vadd.f32 %v166, %v236
        %v265 = vadd.f32 %v167, %v240
        %v266 = vadd.f32 %v168, %v244
        %v267 = vadd.f32 %v169, %v248
        %v268 = vadd.f32 %v170, %v252
        %vm269 = vcmask 254976
        %270 = vst.msk [vmem:[%s150] sm:$0x3] %vm269, %v261
        %271 = vst.msk [vmem:[%s150 + $0x2] sm:$0x3] %vm269, %v262
        %272 = vst.msk [vmem:[%s150 + $0x4] sm:$0x3] %vm269, %v263
        %273 = vst.msk [vmem:[%s150 + $0x6] sm:$0x3] %vm269, %v264
        %274 = vst.msk [vmem:[%s150 + $0x8] sm:$0x3] %vm269, %v265
        %275 = vst.msk [vmem:[%s150 + $0xa] sm:$0x3] %vm269, %v266
        %276 = vst.msk [vmem:[%s150 + $0xc] sm:$0x3] %vm269, %v267
        %277 = vst.msk [vmem:[%s150 + $0xe] sm:$0x3] %vm269, %v268
        %s278 = sand.u32 %s76, 1
        %s279 = scalar_lea.sflag [#allocation3], %s278
        %s280 = sand.u32 %s76, 1
        %s281 = smul.addr %s280, 16
        %s282 = scalar_lea.vmem [#allocation2], %s281
        // Predicated region
        $region29: #{tpu_custom_call.1} parent=27 // pred_check
          %p283 = pneg %p86
        $region30: #{tpu_custom_call.1} parent=27 // pred_check_branch
          %285 = sbr.rel (%p283) target = $region32
        $region31: #{tpu_custom_call.1} parent=27 // pred_region
          %s286 = smul.u32 8, %s16
          %s288 = ssub.s32 256, 256
          %289 = vsyncadd %s279, %s288
          %s290 = smul.addr %s286, 32
          %s291 = scalar_lea.hbm %s2, %s290
          %s292 = sshll.u32 %s282, 4
          %s293 = int_to_ptr.vmem [resolvable:$true] %s292
          %298 = dma.vmem_to_hbm [thread:$0]  %s293, 256, %s291, %s279, 32, 32, 2
        $region32: #{tpu_custom_call.1} parent=27 // pred_fallthru
          _
      $region28: #{tpu_custom_call.1} parent=5 // pred_fallthru
        _
      %p299 = scmp.le.s32.totalorder 2, %s11
      // Predicated region
      $region33: #{tpu_custom_call.1} parent=5 // pred_check
        %p300 = pneg %p299
      $region34: #{tpu_custom_call.1} parent=5 // pred_check_branch
        %302 = sbr.rel (%p300) target = $region36
      $region35: #{tpu_custom_call.1} parent=5 // pred_region
        %s303 = ssub.s32 %s11, 2
        // Predicated region
        $region37: #{tpu_custom_call.1} parent=35 // pred_check
          %p304 = pneg %p92
        $region38: #{tpu_custom_call.1} parent=35 // pred_check_branch
          %306 = sbr.rel (%p304) target = $region40
        $region39: #{tpu_custom_call.1} parent=35 // pred_region
          %s307 = sand.u32 %s77, 1
          %s308 = scalar_lea.sflag [#allocation3], %s307
          %s309 = sand.u32 %s77, 1
          %s310 = smul.addr %s309, 16
          %s311 = scalar_lea.vmem [#allocation2], %s310
          %312 = dma.done %s308, 256
        $region40: #{tpu_custom_call.1} parent=35 // pred_fallthru
          _
      $region36: #{tpu_custom_call.1} parent=5 // pred_fallthru
        _
    $region6: #{tpu_custom_call.1} parent=1 // loop_footer
      %s15 = sadd.s32 1, %s11
    $region7: #{tpu_custom_call.1} parent=1 // loop_footer_branch
      %10 = sbr.rel target = $region3
    $region8: #{tpu_custom_call.1} parent=1 // loop_exit
      _
    %313 = vsyncpa [#allocation3], 1
    %s314 = scalar_lea.sflag [#allocation3], 1
    %315 = vsyncpa %s314, 1

</llo_original>
